<compile_context>
chip_gen: v6e
topology: v6e:2x2x1
jax: 0.10.0
libtpu: 0.0.40
codegen_flags: <defaults>
</compile_context>

<pallas_src>
import functools

import jax
import jax.numpy as jnp
from jax import lax
from jax.experimental import pallas as pl
from jax.experimental.pallas import tpu as pltpu


def _smoothed_ce_kernel(
    x_ref, tgt_ref, out_ref,
    m_sc, s_sc, nf_sc, sx_sc, xt_sc, tf_sc,
    *, smoothing, ignore_index, n_classes, c_chunk, class_padded):
    """Grid = (batch, time_blocks, class_blocks); class axis is the innermost reduction.

    x_ref   : (C_CHUNK, TILE_T) logits tile (classes on sublanes, time on lanes)
    tgt_ref : (1, TILE_T)       int32 targets (padded time columns hold ignore_index)
    out_ref : (1, TILE_T)       f32 per-(batch, time-block) loss, written at the last class step
    scratch : six (1, TILE_T) f32 running stats carried across the class axis:
              m  running max of finite logits        s  running sum of exp(x - m)
              nf count of finite classes             sx sum of finite logits
              xt target-class logit (if finite)      tf 1.0 iff the target-class logit is finite
    """
    cb = pl.program_id(2)
    neg_large = jnp.float32(-1e30)

    @pl.when(cb == 0)
    def _():
        m_sc[...] = jnp.full(m_sc.shape, neg_large, m_sc.dtype)
        s_sc[...] = jnp.zeros_like(s_sc)
        nf_sc[...] = jnp.zeros_like(nf_sc)
        sx_sc[...] = jnp.zeros_like(sx_sc)
        xt_sc[...] = jnp.zeros_like(xt_sc)
        tf_sc[...] = jnp.zeros_like(tf_sc)

    x = x_ref[...].astype(jnp.float32)          # (CC, TT); bf16 inputs upcast in-register
    tgt = tgt_ref[...]                          # (1, TT) int32

    cc, tt = x.shape
    cls_local = lax.broadcasted_iota(jnp.int32, (cc, tt), 0)
    base = cb * c_chunk                         # first class id of this chunk

    finite = jnp.isfinite(x)
    if class_padded:
        # Rows past n_classes in the (ragged) last class block are padding/garbage.
        finite = finite & (cls_local < (n_classes - base))

    xm = jnp.where(finite, x, neg_large)        # for max / exp
    xz = jnp.where(finite, x, 0.0)              # for sum of finite logits

    # --- online log-sum-exp over the class axis (axis 0 == sublanes) ---
    chunk_max = jnp.max(xm, axis=0, keepdims=True)          # (1, TT)
    m_prev = m_sc[...]
    m_new = jnp.maximum(m_prev, chunk_max)
    s_sc[...] = s_sc[...] * jnp.exp(m_prev - m_new) + jnp.sum(
        jnp.exp(xm - m_new), axis=0, keepdims=True)
    m_sc[...] = m_new

    nf_sc[...] += jnp.sum(finite.astype(jnp.float32), axis=0, keepdims=True)
    sx_sc[...] += jnp.sum(xz, axis=0, keepdims=True)

    onehot = (cls_local == (tgt - base)) & finite            # (CC, TT)
    xt_sc[...] += jnp.sum(jnp.where(onehot, x, 0.0), axis=0, keepdims=True)
    tf_sc[...] += jnp.sum(onehot.astype(jnp.float32), axis=0, keepdims=True)

    @pl.when(cb == pl.num_programs(2) - 1)
    def _():
        lse = jnp.log(s_sc[...]) + m_sc[...]                 # (1, TT)
        nf = nf_sc[...]
        # Factorized loss (no per-element smoothed distribution / log-prob tensor):
        #   S1 = sum over finite classes of log p = sum_finite(x) - n_finite * lse
        #   S2 = log p at the target class (0 if the target class logit is not finite)
        s1 = sx_sc[...] - nf * lse
        s2 = xt_sc[...] - tf_sc[...] * lse
        sp = jnp.float32(smoothing) / jnp.maximum(nf, 1.0)   # guard all-(-inf) columns
        loss = -(sp * s1 + jnp.float32(1.0 - smoothing) * s2)
        valid = tgt != jnp.int32(ignore_index)               # False on padded time columns too
        out_ref[...] = jnp.where(valid, loss, 0.0)


def _choose_tiles(n_classes, seq_len, itemsize, block_budget_bytes):
    """Pick (tile_t, c_chunk): lane tile a multiple of 128 (or the full T when T < 128),
    class chunk a multiple of 8 (or the full C), such that the DMA'd logits block stays
    inside the per-block VMEM budget."""
    if seq_len >= 128:
        tile_t = min(512, 128 * pl.cdiv(seq_len, 128))
    else:
        tile_t = seq_len                          # short full time axis; legal block dim
    rows_budget = max(block_budget_bytes // max(tile_t * itemsize, 1), 8)
    if n_classes <= rows_budget:
        c_chunk = n_classes                       # single class block (full dim is legal)
    else:
        c_chunk = max((rows_budget // 8) * 8, 8)
    return int(tile_t), int(c_chunk)


def smoothed_cross_entropy_loss(
    logits,                       # [B, C, T] float32/bfloat16 logits (classes on dim 1)
    target,                       # [B, T] int
    smoothing: float = 0.1,
    ignore_index: int = -100,
    reduction: str = "batchmean",
    tile_t=None,
    c_chunk=None,
    vmem_limit_bytes=None,
):
    assert 0.0 < smoothing < 1.0
    assert reduction in {"batchmean", "sum"}
    # TODO(synk): reduction='none' ([B*T, C] elementwise loss matrix) is not implemented here.

    b, c, t = logits.shape
    n = b * t
    itemsize = jnp.dtype(logits.dtype).itemsize

    # Generation-aware VMEM budgets: 128 MiB physical on v5e/v6e, 64 MiB on v7x.
    if vmem_limit_bytes is None:
        try:
            vmem_cap = int(pltpu.get_tpu_info().vmem_capacity_bytes)
        except Exception:                      # unknown chip: assume the v7x floor
            vmem_cap = 64 * 1024 * 1024
        vmem_limit_bytes = min((vmem_cap * 3) // 4, 96 * 1024 * 1024)
    # The logits block is double-buffered and the kernel keeps ~5 full-block f32
    # temporaries live, so cap the block itself at ~1/12 of the scoped limit.
    block_budget = max(int(vmem_limit_bytes) // 12, 1 << 20)

    auto_tt, auto_cc = _choose_tiles(c, t, itemsize, block_budget)
    tile_t = auto_tt if tile_t is None else int(tile_t)
    c_chunk = auto_cc if c_chunk is None else int(c_chunk)

    n_tb = pl.cdiv(t, tile_t)
    n_cb = pl.cdiv(c, c_chunk)
    t_pad = n_tb * tile_t
    class_padded = (n_cb * c_chunk != c)

    # Pad only the (cheap) targets to the lane grid with ignore_index; logits are NOT padded:
    # boundary blocks are neutralized in-kernel (padded targets -> 0, class-id mask on ragged C).
    tgt3 = target.astype(jnp.int32).reshape(b, 1, t)
    if t_pad != t:
        tgt3 = jnp.pad(tgt3, ((0, 0), (0, 0), (0, t_pad - t)),
                       constant_values=ignore_index)

    kernel = functools.partial(
        _smoothed_ce_kernel,
        smoothing=float(smoothing), ignore_index=int(ignore_index),
        n_classes=int(c), c_chunk=int(c_chunk), class_padded=bool(class_padded))

    cost = pl.CostEstimate(
        flops=10 * b * c * t,
        transcendentals=b * c * t,
        bytes_accessed=b * c * t * itemsize + b * t_pad * 4 + b * n_tb * tile_t * 4)

    partials = pl.pallas_call(
        kernel,
        out_shape=jax.ShapeDtypeStruct((b, n_tb, 1, tile_t), jnp.float32),
        grid_spec=pltpu.PrefetchScalarGridSpec(
            num_scalar_prefetch=0,
            grid=(b, n_tb, n_cb),                      # class (reduction) axis last
            in_specs=[
                # logits tile: (C_CHUNK, TILE_T), classes on sublanes, time on lanes
                pl.BlockSpec((None, c_chunk, tile_t), lambda bi, ti, cb: (bi, cb, ti)),
                # targets tile: (1, TILE_T), constant across the class axis
                pl.BlockSpec((None, 1, tile_t), lambda bi, ti, cb: (bi, 0, ti)),
            ],
            # lane-dense per-(batch, time-block) loss slot, resident across the class axis
            out_specs=pl.BlockSpec((None, None, 1, tile_t),
                                   lambda bi, ti, cb: (bi, ti, 0, 0)),
            scratch_shapes=[pltpu.VMEM((1, tile_t), jnp.float32)] * 6,
        ),
        compiler_params=pltpu.CompilerParams(
            dimension_semantics=("parallel", "parallel", "arbitrary"),
            vmem_limit_bytes=int(vmem_limit_bytes)),
        cost_estimate=cost,
    )(logits, tgt3)

    total = jnp.sum(partials)       # single cross-lane reduce, done once outside the kernel
    if reduction == "batchmean":
        return total / jnp.float32(n)
    return total  # 'sum'


def _reference_loss(logits, target, smoothing, ignore_index, reduction="batchmean"):
    """Pure-JAX reference mirroring the PyTorch module."""
    b, c, t = logits.shape
    n = b * t
    x = jnp.transpose(logits, (0, 2, 1)).reshape(n, c)
    tgt = target.reshape(n)
    log_p = jax.nn.log_softmax(x, axis=-1)
    fin = jnp.isfinite(log_p)
    n_cls = fin.sum(-1, keepdims=True).astype(jnp.float32)
    sp = smoothing / n_cls
    onehot = jax.nn.one_hot(tgt, c, dtype=bool)
    smoothed = jnp.where(onehot, 1.0 - smoothing + sp, jnp.where(fin, sp, 0.0))
    smoothed = jnp.where((tgt != ignore_index)[:, None], smoothed, 0.0)
    loss = -smoothed * jnp.where(fin, log_p, 0.0)
    if reduction == "batchmean":
        return loss.sum() / n
    return loss.sum()


if __name__ == "__main__":
    key = jax.random.PRNGKey(0)
    k1, k2, k3, k4, k5, k6 = jax.random.split(key, 6)

    # ---- test 1: small shapes matching the module's convention (B, C, T) ----
    B, C, T = 2, 32, 8
    logits = jax.random.normal(k1, (B, C, T), dtype=jnp.float32)
    # mask a few logits to -inf to exercise the finite-class handling
    logits = logits.at[0, 3, 1].set(-jnp.inf)
    logits = logits.at[1, 7, 2].set(-jnp.inf)
    logits = logits.at[1, 8, 2].set(-jnp.inf)
    target = jax.random.randint(k2, (B, T), 0, C, dtype=jnp.int32)
    target = target.at[0, 5].set(-100)          # ignore_index position

    out = jax.block_until_ready(
        smoothed_cross_entropy_loss(logits, target, 0.1, -100, "batchmean"))
    ref = _reference_loss(logits, target, 0.1, -100, "batchmean")
    assert jnp.allclose(out, ref, rtol=1e-5, atol=1e-5), (out, ref)

    out_sum = jax.block_until_ready(
        smoothed_cross_entropy_loss(logits, target, 0.1, -100, "sum"))
    ref_sum = _reference_loss(logits, target, 0.1, -100, "sum")
    assert jnp.allclose(out_sum, ref_sum, rtol=1e-5, atol=1e-5), (out_sum, ref_sum)

    # ---- test 2: multi-chunk online log-sum-exp + multiple time tiles (even tiling) ----
    B2, C2, T2 = 2, 96, 256
    logits2 = jax.random.normal(k3, (B2, C2, T2), dtype=jnp.float32)
    logits2 = logits2.at[0, 11, 7].set(-jnp.inf)
    logits2 = logits2.at[1, 40, 200].set(-jnp.inf)
    target2 = jax.random.randint(k4, (B2, T2), 0, C2, dtype=jnp.int32)
    target2 = target2.at[1, 9].set(-100)
    out2 = jax.block_until_ready(
        smoothed_cross_entropy_loss(logits2, target2, 0.1, -100, "batchmean",
                                    tile_t=128, c_chunk=32))
    ref2 = _reference_loss(logits2, target2, 0.1, -100, "batchmean")
    assert jnp.allclose(out2, ref2, rtol=1e-5, atol=1e-5), (out2, ref2)

    # ---- test 3: ragged C and T (masked boundary class block + ignore_index-padded time) ----
    B3, C3, T3 = 2, 100, 200
    logits3 = jax.random.normal(k5, (B3, C3, T3), dtype=jnp.float32)
    logits3 = logits3.at[0, 99, 0].set(-jnp.inf)
    logits3 = logits3.at[1, 5, 150].set(-jnp.inf)
    target3 = jax.random.randint(k6, (B3, T3), 0, C3, dtype=jnp.int32)
    target3 = target3.at[0, 150].set(-100)
    out3 = jax.block_until_ready(
        smoothed_cross_entropy_loss(logits3, target3, 0.1, -100, "sum",
                                    tile_t=128, c_chunk=32))
    ref3 = _reference_loss(logits3, target3, 0.1, -100, "sum")
    assert jnp.allclose(out3, ref3, rtol=1e-5, atol=1e-5), (out3, ref3)

    print("KERNEL_OK")
</pallas_src>

<mosaic_0001>
module attributes {stable_mosaic.version = 11 : i64} {
  func.func @_smoothed_ce_kernel(%arg0: i32, %arg1: i32, %arg2: i32, %arg3: memref<1x32x8xf32, #tpu.memory_space<vmem>>, %arg4: memref<1x1x8xi32, #tpu.memory_space<vmem>>, %arg5: memref<1x1x1x8xf32, #tpu.memory_space<vmem>>, %arg6: memref<1x8xf32, #tpu.memory_space<vmem>>, %arg7: memref<1x8xf32, #tpu.memory_space<vmem>>, %arg8: memref<1x8xf32, #tpu.memory_space<vmem>>, %arg9: memref<1x8xf32, #tpu.memory_space<vmem>>, %arg10: memref<1x8xf32, #tpu.memory_space<vmem>>, %arg11: memref<1x8xf32, #tpu.memory_space<vmem>>) attributes {dimension_semantics = [#tpu.dimension_semantics<parallel>, #tpu.dimension_semantics<parallel>, #tpu.dimension_semantics<arbitrary>], iteration_bounds = array<i64: 2, 1, 1>, scalar_prefetch = 0 : i64, scratch_operands = 6 : i64, tpu.core_type = #tpu.core_type<tc>, window_params = [{transform_indices = @transform_0, window_bounds = array<i64: 1, 32, 8>}, {transform_indices = @transform_1, window_bounds = array<i64: 1, 1, 8>}, {transform_indices = @transform_2, window_bounds = array<i64: 1, 1, 1, 8>}]} {
    %c0_i32 = arith.constant 0 : i32
    %0 = arith.cmpi eq, %arg2, %c0_i32 : i32
    %1 = arith.extui %0 : i1 to i32
    %cst = arith.constant -1.000000e+30 : f32
    %c0_i32_0 = arith.constant 0 : i32
    %2 = arith.cmpi ne, %1, %c0_i32_0 : i32
    scf.if %2 {
      %65 = vector.broadcast %cst : f32 to vector<1x8xf32>
      %c0_42 = arith.constant 0 : index
      %c0_43 = arith.constant 0 : index
      %66 = vector.load %arg6[%c0_42, %c0_43] : memref<1x8xf32, #tpu.memory_space<vmem>>, vector<1x8xf32>
      tpu.vector_store %arg6[%c0_42, %c0_43], %65 {strides = array<i32>} : memref<1x8xf32, #tpu.memory_space<vmem>>, vector<1x8xf32>,
      %cst_44 = arith.constant 0.000000e+00 : f32
      %67 = vector.broadcast %cst_44 : f32 to vector<1x8xf32>
      %c0_45 = arith.constant 0 : index
      %c0_46 = arith.constant 0 : index
      %68 = vector.load %arg7[%c0_45, %c0_46] : memref<1x8xf32, #tpu.memory_space<vmem>>, vector<1x8xf32>
      tpu.vector_store %arg7[%c0_45, %c0_46], %67 {strides = array<i32>} : memref<1x8xf32, #tpu.memory_space<vmem>>, vector<1x8xf32>,
      %cst_47 = arith.constant 0.000000e+00 : f32
      %69 = vector.broadcast %cst_47 : f32 to vector<1x8xf32>
      %c0_48 = arith.constant 0 : index
      %c0_49 = arith.constant 0 : index
      %70 = vector.load %arg8[%c0_48, %c0_49] : memref<1x8xf32, #tpu.memory_space<vmem>>, vector<1x8xf32>
      tpu.vector_store %arg8[%c0_48, %c0_49], %69 {strides = array<i32>} : memref<1x8xf32, #tpu.memory_space<vmem>>, vector<1x8xf32>,
      %cst_50 = arith.constant 0.000000e+00 : f32
      %71 = vector.broadcast %cst_50 : f32 to vector<1x8xf32>
      %c0_51 = arith.constant 0 : index
      %c0_52 = arith.constant 0 : index
      %72 = vector.load %arg9[%c0_51, %c0_52] : memref<1x8xf32, #tpu.memory_space<vmem>>, vector<1x8xf32>
      tpu.vector_store %arg9[%c0_51, %c0_52], %71 {strides = array<i32>} : memref<1x8xf32, #tpu.memory_space<vmem>>, vector<1x8xf32>,
      %cst_53 = arith.constant 0.000000e+00 : f32
      %73 = vector.broadcast %cst_53 : f32 to vector<1x8xf32>
      %c0_54 = arith.constant 0 : index
      %c0_55 = arith.constant 0 : index
      %74 = vector.load %arg10[%c0_54, %c0_55] : memref<1x8xf32, #tpu.memory_space<vmem>>, vector<1x8xf32>
      tpu.vector_store %arg10[%c0_54, %c0_55], %73 {strides = array<i32>} : memref<1x8xf32, #tpu.memory_space<vmem>>, vector<1x8xf32>,
      %cst_56 = arith.constant 0.000000e+00 : f32
      %75 = vector.broadcast %cst_56 : f32 to vector<1x8xf32>
      %c0_57 = arith.constant 0 : index
      %c0_58 = arith.constant 0 : index
      %76 = vector.load %arg11[%c0_57, %c0_58] : memref<1x8xf32, #tpu.memory_space<vmem>>, vector<1x8xf32>
      tpu.vector_store %arg11[%c0_57, %c0_58], %75 {strides = array<i32>} : memref<1x8xf32, #tpu.memory_space<vmem>>, vector<1x8xf32>,
    } else {
    }
    %c0 = arith.constant 0 : index
    %c0_1 = arith.constant 0 : index
    %c0_2 = arith.constant 0 : index
    %3 = vector.load %arg3[%c0, %c0_1, %c0_2] : memref<1x32x8xf32, #tpu.memory_space<vmem>>, vector<1x32x8xf32>
    %4 = vector.shape_cast %3 : vector<1x32x8xf32> to vector<32x8xf32>
    %c0_3 = arith.constant 0 : index
    %c0_4 = arith.constant 0 : index
    %c0_5 = arith.constant 0 : index
    %5 = vector.load %arg4[%c0_3, %c0_4, %c0_5] : memref<1x1x8xi32, #tpu.memory_space<vmem>>, vector<1x1x8xi32>
    %6 = vector.shape_cast %5 : vector<1x1x8xi32> to vector<1x8xi32>
    %7 = tpu.iota {dimensions = array<i32: 0>} : vector<32x8xi32>
    %c32_i32 = arith.constant 32 : i32
    %8 = arith.muli %arg2, %c32_i32 : i32
    %9 = tpu.weird %4 : vector<32x8xf32> -> vector<32x8xi1>
    %cst_6 = arith.constant dense<true> : vector<32x8xi1>
    %10 = arith.xori %9, %cst_6 : vector<32x8xi1>
    %cst_7 = arith.constant -1.000000e+30 : f32
    %11 = vector.broadcast %cst_7 : f32 to vector<32x8xf32>
    %12 = arith.select %10, %4, %11 : vector<32x8xi1>, vector<32x8xf32>
    %cst_8 = arith.constant 0.000000e+00 : f32
    %13 = vector.broadcast %cst_8 : f32 to vector<32x8xf32>
    %14 = arith.select %10, %4, %13 : vector<32x8xi1>, vector<32x8xf32>
    %cst_9 = arith.constant dense<0xFF800000> : vector<8xf32>
    %15 = vector.multi_reduction <maximumf>, %12, %cst_9 [0] : vector<32x8xf32> to vector<8xf32>
    %16 = vector.shape_cast %15 : vector<8xf32> to vector<1x8xf32>
    %c0_10 = arith.constant 0 : index
    %c0_11 = arith.constant 0 : index
    %17 = vector.load %arg6[%c0_10, %c0_11] : memref<1x8xf32, #tpu.memory_space<vmem>>, vector<1x8xf32>
    %18 = arith.maximumf %17, %16 : vector<1x8xf32>
    %c0_12 = arith.constant 0 : index
    %c0_13 = arith.constant 0 : index
    %19 = vector.load %arg7[%c0_12, %c0_13] : memref<1x8xf32, #tpu.memory_space<vmem>>, vector<1x8xf32>
    %20 = arith.subf %17, %18 : vector<1x8xf32>
    %21 = math.exp %20 : vector<1x8xf32>
    %22 = arith.mulf %19, %21 : vector<1x8xf32>
    %23 = vector.broadcast %18 : vector<1x8xf32> to vector<32x8xf32>
    %24 = arith.subf %12, %23 : vector<32x8xf32>
    %25 = math.exp %24 : vector<32x8xf32>
    %cst_14 = arith.constant dense<0.000000e+00> : vector<8xf32>
    %26 = vector.multi_reduction <add>, %25, %cst_14 [0] : vector<32x8xf32> to vector<8xf32>
    %27 = vector.shape_cast %26 : vector<8xf32> to vector<1x8xf32>
    %28 = arith.addf %22, %27 : vector<1x8xf32>
    %c0_15 = arith.constant 0 : index
    %c0_16 = arith.constant 0 : index
    %29 = vector.load %arg7[%c0_15, %c0_16] : memref<1x8xf32, #tpu.memory_space<vmem>>, vector<1x8xf32>
    tpu.vector_store %arg7[%c0_15, %c0_16], %28 {strides = array<i32>} : memref<1x8xf32, #tpu.memory_space<vmem>>, vector<1x8xf32>,
    %c0_17 = arith.constant 0 : index
    %c0_18 = arith.constant 0 : index
    %30 = vector.load %arg6[%c0_17, %c0_18] : memref<1x8xf32, #tpu.memory_space<vmem>>, vector<1x8xf32>
    tpu.vector_store %arg6[%c0_17, %c0_18], %18 {strides = array<i32>} : memref<1x8xf32, #tpu.memory_space<vmem>>, vector<1x8xf32>,
    %c0_19 = arith.constant 0 : index
    %c0_20 = arith.constant 0 : index
    %31 = vector.load %arg8[%c0_19, %c0_20] : memref<1x8xf32, #tpu.memory_space<vmem>>, vector<1x8xf32>
    %32 = arith.extui %10 : vector<32x8xi1> to vector<32x8xi32>
    %33 = arith.sitofp %32 : vector<32x8xi32> to vector<32x8xf32>
    %cst_21 = arith.constant dense<0.000000e+00> : vector<8xf32>
    %34 = vector.multi_reduction <add>, %33, %cst_21 [0] : vector<32x8xf32> to vector<8xf32>
    %35 = vector.shape_cast %34 : vector<8xf32> to vector<1x8xf32>
    %36 = arith.addf %31, %35 : vector<1x8xf32>
    %c0_22 = arith.constant 0 : index
    %c0_23 = arith.constant 0 : index
    %37 = vector.load %arg8[%c0_22, %c0_23] : memref<1x8xf32, #tpu.memory_space<vmem>>, vector<1x8xf32>
    tpu.vector_store %arg8[%c0_22, %c0_23], %36 {strides = array<i32>} : memref<1x8xf32, #tpu.memory_space<vmem>>, vector<1x8xf32>,
    %c0_24 = arith.constant 0 : index
    %c0_25 = arith.constant 0 : index
    %38 = vector.load %arg9[%c0_24, %c0_25] : memref<1x8xf32, #tpu.memory_space<vmem>>, vector<1x8xf32>
    %cst_26 = arith.constant dense<0.000000e+00> : vector<8xf32>
    %39 = vector.multi_reduction <add>, %14, %cst_26 [0] : vector<32x8xf32> to vector<8xf32>
    %40 = vector.shape_cast %39 : vector<8xf32> to vector<1x8xf32>
    %41 = arith.addf %38, %40 : vector<1x8xf32>
    %c0_27 = arith.constant 0 : index
    %c0_28 = arith.constant 0 : index
    %42 = vector.load %arg9[%c0_27, %c0_28] : memref<1x8xf32, #tpu.memory_space<vmem>>, vector<1x8xf32>
    tpu.vector_store %arg9[%c0_27, %c0_28], %41 {strides = array<i32>} : memref<1x8xf32, #tpu.memory_space<vmem>>, vector<1x8xf32>,
    %43 = vector.broadcast %8 : i32 to vector<1x8xi32>
    %44 = arith.subi %6, %43 : vector<1x8xi32>
    %45 = vector.broadcast %44 : vector<1x8xi32> to vector<32x8xi32>
    %46 = arith.cmpi eq, %7, %45 : vector<32x8xi32>
    %47 = arith.andi %46, %10 : vector<32x8xi1>
    %c0_29 = arith.constant 0 : index
    %c0_30 = arith.constant 0 : index
    %48 = vector.load %arg10[%c0_29, %c0_30] : memref<1x8xf32, #tpu.memory_space<vmem>>, vector<1x8xf32>
    %cst_31 = arith.constant 0.000000e+00 : f32
    %49 = vector.broadcast %cst_31 : f32 to vector<32x8xf32>
    %50 = arith.select %47, %4, %49 : vector<32x8xi1>, vector<32x8xf32>
    %cst_32 = arith.constant dense<0.000000e+00> : vector<8xf32>
    %51 = vector.multi_reduction <add>, %50, %cst_32 [0] : vector<32x8xf32> to vector<8xf32>
    %52 = vector.shape_cast %51 : vector<8xf32> to vector<1x8xf32>
    %53 = arith.addf %48, %52 : vector<1x8xf32>
    %c0_33 = arith.constant 0 : index
    %c0_34 = arith.constant 0 : index
    %54 = vector.load %arg10[%c0_33, %c0_34] : memref<1x8xf32, #tpu.memory_space<vmem>>, vector<1x8xf32>
    tpu.vector_store %arg10[%c0_33, %c0_34], %53 {strides = array<i32>} : memref<1x8xf32, #tpu.memory_space<vmem>>, vector<1x8xf32>,
    %c0_35 = arith.constant 0 : index
    %c0_36 = arith.constant 0 : index
    %55 = vector.load %arg11[%c0_35, %c0_36] : memref<1x8xf32, #tpu.memory_space<vmem>>, vector<1x8xf32>
    %56 = arith.extui %47 : vector<32x8xi1> to vector<32x8xi32>
    %57 = arith.sitofp %56 : vector<32x8xi32> to vector<32x8xf32>
    %cst_37 = arith.constant dense<0.000000e+00> : vector<8xf32>
    %58 = vector.multi_reduction <add>, %57, %cst_37 [0] : vector<32x8xf32> to vector<8xf32>
    %59 = vector.shape_cast %58 : vector<8xf32> to vector<1x8xf32>
    %60 = arith.addf %55, %59 : vector<1x8xf32>
    %c0_38 = arith.constant 0 : index
    %c0_39 = arith.constant 0 : index
    %61 = vector.load %arg11[%c0_38, %c0_39] : memref<1x8xf32, #tpu.memory_space<vmem>>, vector<1x8xf32>
    tpu.vector_store %arg11[%c0_38, %c0_39], %60 {strides = array<i32>} : memref<1x8xf32, #tpu.memory_space<vmem>>, vector<1x8xf32>,
    %c0_i32_40 = arith.constant 0 : i32
    %62 = arith.cmpi eq, %arg2, %c0_i32_40 : i32
    %63 = arith.extui %62 : i1 to i32
    %c0_i32_41 = arith.constant 0 : i32
    %64 = arith.cmpi ne, %63, %c0_i32_41 : i32
    scf.if %64 {
      %c0_42 = arith.constant 0 : index
      %c0_43 = arith.constant 0 : index
      %65 = vector.load %arg7[%c0_42, %c0_43] : memref<1x8xf32, #tpu.memory_space<vmem>>, vector<1x8xf32>
      %66 = math.log %65 : vector<1x8xf32>
      %c0_44 = arith.constant 0 : index
      %c0_45 = arith.constant 0 : index
      %67 = vector.load %arg6[%c0_44, %c0_45] : memref<1x8xf32, #tpu.memory_space<vmem>>, vector<1x8xf32>
      %68 = arith.addf %66, %67 : vector<1x8xf32>
      %c0_46 = arith.constant 0 : index
      %c0_47 = arith.constant 0 : index
      %69 = vector.load %arg8[%c0_46, %c0_47] : memref<1x8xf32, #tpu.memory_space<vmem>>, vector<1x8xf32>
      %c0_48 = arith.constant 0 : index
      %c0_49 = arith.constant 0 : index
      %70 = vector.load %arg9[%c0_48, %c0_49] : memref<1x8xf32, #tpu.memory_space<vmem>>, vector<1x8xf32>
      %71 = arith.mulf %69, %68 : vector<1x8xf32>
      %72 = arith.subf %70, %71 : vector<1x8xf32>
      %c0_50 = arith.constant 0 : index
      %c0_51 = arith.constant 0 : index
      %73 = vector.load %arg10[%c0_50, %c0_51] : memref<1x8xf32, #tpu.memory_space<vmem>>, vector<1x8xf32>
      %c0_52 = arith.constant 0 : index
      %c0_53 = arith.constant 0 : index
      %74 = vector.load %arg11[%c0_52, %c0_53] : memref<1x8xf32, #tpu.memory_space<vmem>>, vector<1x8xf32>
      %75 = arith.mulf %74, %68 : vector<1x8xf32>
      %76 = arith.subf %73, %75 : vector<1x8xf32>
      %cst_54 = arith.constant 1.000000e+00 : f32
      %77 = vector.broadcast %cst_54 : f32 to vector<1x8xf32>
      %78 = arith.maximumf %69, %77 : vector<1x8xf32>
      %cst_55 = arith.constant 1.000000e-01 : f32
      %79 = vector.broadcast %cst_55 : f32 to vector<1x8xf32>
      %80 = arith.divf %79, %78 : vector<1x8xf32>
      %81 = arith.mulf %80, %72 : vector<1x8xf32>
      %cst_56 = arith.constant 0.899999976 : f32
      %82 = vector.broadcast %cst_56 : f32 to vector<1x8xf32>
      %83 = arith.mulf %82, %76 : vector<1x8xf32>
      %84 = arith.addf %81, %83 : vector<1x8xf32>
      %cst_57 = arith.constant 0.000000e+00 : f32
      %85 = vector.broadcast %cst_57 : f32 to vector<1x8xf32>
      %86 = arith.subf %85, %84 : vector<1x8xf32>
      %c-100_i32 = arith.constant -100 : i32
      %87 = vector.broadcast %c-100_i32 : i32 to vector<1x8xi32>
      %88 = arith.cmpi ne, %6, %87 : vector<1x8xi32>
      %cst_58 = arith.constant 0.000000e+00 : f32
      %89 = vector.broadcast %cst_58 : f32 to vector<1x8xf32>
      %90 = arith.select %88, %86, %89 : vector<1x8xi1>, vector<1x8xf32>
      %c0_59 = arith.constant 0 : index
      %c0_60 = arith.constant 0 : index
      %c0_61 = arith.constant 0 : index
      %c0_62 = arith.constant 0 : index
      %91 = vector.load %arg5[%c0_59, %c0_60, %c0_61, %c0_62] : memref<1x1x1x8xf32, #tpu.memory_space<vmem>>, vector<1x1x1x8xf32>
      %92 = vector.shape_cast %91 : vector<1x1x1x8xf32> to vector<1x8xf32>
      %93 = vector.shape_cast %90 : vector<1x8xf32> to vector<1x1x1x8xf32>
      tpu.vector_store %arg5[%c0_59, %c0_60, %c0_61, %c0_62], %93 {strides = array<i32>} : memref<1x1x1x8xf32, #tpu.memory_space<vmem>>, vector<1x1x1x8xf32>,
    } else {
    }
    return
  }
  func.func @transform_0(%arg0: i32, %arg1: i32, %arg2: i32) -> (i32, i32, i32) {
    %c0_i32 = arith.constant 0 : i32
    return %arg0, %arg2, %arg1 : i32, i32, i32
  }
  func.func @transform_1(%arg0: i32, %arg1: i32, %arg2: i32) -> (i32, i32, i32) {
    %c0_i32 = arith.constant 0 : i32
    %c0_i32_0 = arith.constant 0 : i32
    return %arg0, %c0_i32, %arg1 : i32, i32, i32
  }
  func.func @transform_2(%arg0: i32, %arg1: i32, %arg2: i32) -> (i32, i32, i32, i32) {
    %c0_i32 = arith.constant 0 : i32
    %c0_i32_0 = arith.constant 0 : i32
    %c0_i32_1 = arith.constant 0 : i32
    return %arg0, %arg1, %c0_i32, %c0_i32_0 : i32, i32, i32, i32
  }
}

</mosaic_0001>

<llo_original>
// kernel: tpu_custom_call.1
$region0: #{tpu_custom_call.1}
  #allocation0 [shape = 'u32[]', space=smem, size = 0x4, offset = 0x4, fixed_abs, tag = 'smem constant byte address 0x4 - core index']
  #allocation1 [shape = 'u32[144,128]{1,0:T(1,128)}', space=vmem, size = 0x12000, scoped, tag = 'internal scratch']
  #allocation2 [shape = 'f32[1,8]{1,0:T(1,128)}', space=vmem, size = 0x200, scoped, tag = 'scratch operand']
  #allocation3 [shape = 'f32[1,8]{1,0:T(1,128)}', space=vmem, size = 0x200, scoped, tag = 'scratch operand']
  #allocation4 [shape = 'f32[1,8]{1,0:T(1,128)}', space=vmem, size = 0x200, scoped, tag = 'scratch operand']
  #allocation5 [shape = 'f32[1,8]{1,0:T(1,128)}', space=vmem, size = 0x200, scoped, tag = 'scratch operand']
  #allocation6 [shape = 'f32[1,8]{1,0:T(1,128)}', space=vmem, size = 0x200, scoped, tag = 'scratch operand']
  #allocation7 [shape = 'f32[1,8]{1,0:T(1,128)}', space=vmem, size = 0x200, scoped, tag = 'scratch operand']
  %s0 = inlined_call_operand.vmem [shape: f32[2,32,8], index: 0, kind: input, shape index: {}]
  %s1 = inlined_call_operand.vmem [shape: s32[2,1,8], index: 1, kind: input, shape index: {}]
  %s2 = inlined_call_operand.hbm [shape: f32[2,1,1,8], index: 2, kind: output, shape index: {}]
  %s3 = sld [smem:[#allocation0]]
  $region49: #{tpu_custom_call.1} parent=0
    _
  %s5 = ssub.s32 1, %s3
  %s6 = scalar_select 0, %s5, %s3
  $region1: #{tpu_custom_call.1} parent=0
    #allocation8 [shape = 'u8[1024]{0}', space=vmem, size = 0x400, scoped, tag = 'output window, operand 0']
    #allocation9 [shape = 's32[2]{0}', space=sflag, size = 0x8, scoped, tag = 'scoped memory for tpu_custom_call.1']
    %7 = vsyncpa [#allocation9], 0
    %s8 = scalar_lea.sflag [#allocation9], 1
    %9 = vsyncpa %s8, 0
    loop: start=0, step=1, limit=4
    $region2: #{tpu_custom_call.1} parent=1 // loop_pre_header
      _
    $region3: #{tpu_custom_call.1} parent=1 // loop_header
      %s11 = sphi 0, %s15
      %p12 = scmp.ge.s32.totalorder %s11, 4
      %s18 = sphi 0, %s37
      %s19 = sphi 0, %s33
      %s20 = sphi 0, %s29
      %s21 = sphi 0, %s18
      %s22 = sphi 0, %s19
      %s23 = sphi 0, %s20
      %s24 = sphi 0, %s21
      %s25 = sphi 0, %s22
      %s26 = sphi 0, %s23
      %s44 = sphi 0, %s46
      %s47 = sphi 0, %s44
      %s48 = sphi 0, %s47
      %s64 = sphi 0, %s48
      %s72 = sphi 0, %s74
      %s75 = sphi 0, %s72
      %s76 = sphi 0, %s75
      %s92 = sphi 0, %s76
      %s100 = sphi 0, %s102
      %s103 = sphi 0, %s100
      %s104 = sphi 0, %s103
      %s120 = sphi 0, %s104
    $region4: #{tpu_custom_call.1} parent=1 // loop_header_branch
      %14 = sbr.rel (%p12) target = $region8
    $region5: #{tpu_custom_call.1} parent=1 // loop_body
      %s16 = ssub.s32 %s11, 1
      %s17 = ssub.s32 %s11, 2
      %s27 = sadd.s32 1, %s20
      %p28 = scmp.ge.s32.totalorder %s27, 1
      %s29 = scalar_select %p28, 0, %s27
      %s30 = sadd.s32 1, %s19
      %s31 = scalar_select %p28, %s30, %s19
      %p32 = scmp.ge.s32.totalorder %s31, 1
      %s33 = scalar_select %p32, 0, %s31
      %s34 = sadd.s32 1, %s18
      %s35 = scalar_select %p32, %s34, %s18
      %p36 = scmp.ge.s32.totalorder %s35, 2
      %s37 = scalar_select %p36, 0, %s35
      %s38 = ssub.s32 %s18, %s37
      %s39 = ssub.s32 %s20, %s29
      %s40 = sor.u32 %s38, %s39
      %s41 = ssub.s32 %s19, %s33
      %s42 = sor.u32 %s40, %s41
      %p43 = scmp.eq.s32.totalorder %s42, 0
      %s45 = sadd.s32 %s44, 1
      %s46 = scalar_select %p43, %s44, %s45
      %p49 = pneg %p43
      %p50 = scmp.eq.s32.totalorder %s11, 1
      %p51 = por %p49, %p50
      %p52 = scmp.ne.s32.totalorder %s44, %s47
      %p53 = scmp.eq.s32.totalorder %s11, 0
      %p54 = por %p52, %p53
      %p55 = scmp.ne.s32.totalorder %s44, %s47
      %p56 = scmp.eq.s32.totalorder %s16, 1
      %p57 = por %p55, %p56
      %p58 = scmp.ne.s32.totalorder %s47, %s48
      %p59 = scmp.eq.s32.totalorder %s16, 0
      %p60 = por %p58, %p59
      %p61 = scmp.ne.s32.totalorder %s47, %s48
      %p62 = scmp.eq.s32.totalorder %s17, 1
      %p63 = por %p61, %p62
      %p65 = scmp.ne.s32.totalorder %s48, %s64
      %p66 = scmp.eq.s32.totalorder %s17, 0
      %p67 = por %p65, %p66
      %s68 = ssub.s32 %s18, %s37
      %s69 = ssub.s32 %s19, %s33
      %s70 = sor.u32 %s68, %s69
      %p71 = scmp.eq.s32.totalorder %s70, 0
      %s73 = sadd.s32 %s72, 1
      %s74 = scalar_select %p71, %s72, %s73
      %p77 = pneg %p71
      %p78 = scmp.eq.s32.totalorder %s11, 1
      %p79 = por %p77, %p78
      %p80 = scmp.ne.s32.totalorder %s72, %s75
      %p81 = scmp.eq.s32.totalorder %s11, 0
      %p82 = por %p80, %p81
      %p83 = scmp.ne.s32.totalorder %s72, %s75
      %p84 = scmp.eq.s32.totalorder %s16, 1
      %p85 = por %p83, %p84
      %p86 = scmp.ne.s32.totalorder %s75, %s76
      %p87 = scmp.eq.s32.totalorder %s16, 0
      %p88 = por %p86, %p87
      %p89 = scmp.ne.s32.totalorder %s75, %s76
      %p90 = scmp.eq.s32.totalorder %s17, 1
      %p91 = por %p89, %p90
      %p93 = scmp.ne.s32.totalorder %s76, %s92
      %p94 = scmp.eq.s32.totalorder %s17, 0
      %p95 = por %p93, %p94
      %s96 = ssub.s32 %s18, %s37
      %s97 = ssub.s32 %s19, %s33
      %s98 = sor.u32 %s96, %s97
      %p99 = scmp.eq.s32.totalorder %s98, 0
      %s101 = sadd.s32 %s100, 1
      %s102 = scalar_select %p99, %s100, %s101
      %p105 = pneg %p99
      %p106 = scmp.eq.s32.totalorder %s11, 1
      %p107 = por %p105, %p106
      %p108 = scmp.ne.s32.totalorder %s100, %s103
      %p109 = scmp.eq.s32.totalorder %s11, 0
      %p110 = por %p108, %p109
      %p111 = scmp.ne.s32.totalorder %s100, %s103
      %p112 = scmp.eq.s32.totalorder %s16, 1
      %p113 = por %p111, %p112
      %p114 = scmp.ne.s32.totalorder %s103, %s104
      %p115 = scmp.eq.s32.totalorder %s16, 0
      %p116 = por %p114, %p115
      %p117 = scmp.ne.s32.totalorder %s103, %s104
      %p118 = scmp.eq.s32.totalorder %s17, 1
      %p119 = por %p117, %p118
      %p121 = scmp.ne.s32.totalorder %s104, %s120
      %p122 = scmp.eq.s32.totalorder %s17, 0
      %p123 = por %p121, %p122
      %p124 = scmp.le.s32.totalorder 1, %s11
      %p125 = scmp.lt.s32.totalorder %s11, 3
      %p126 = pnand %p124, %p125
      %p127 = pneg %p126
      // Predicated region
      $region9: #{tpu_custom_call.1} parent=5 // pred_check
        _
      $region10: #{tpu_custom_call.1} parent=5 // pred_check_branch
        %129 = sbr.rel (%p126) target = $region12
      $region11: #{tpu_custom_call.1} parent=5 // pred_region
        %s130 = ssub.s32 %s11, 1
      $region12: #{tpu_custom_call.1} parent=5 // pred_fallthru
        _
      %p131 = scmp.lt.s32.totalorder %s11, 2
      // Predicated region
      $region13: #{tpu_custom_call.1} parent=5 // pred_check
        %p132 = pneg %p131
      $region14: #{tpu_custom_call.1} parent=5 // pred_check_branch
        %134 = sbr.rel (%p132) target = $region16
      $region15: #{tpu_custom_call.1} parent=5 // pred_region
        // Predicated region
        $region17: #{tpu_custom_call.1} parent=15 // pred_check
          %p135 = pneg %p54
        $region18: #{tpu_custom_call.1} parent=15 // pred_check_branch
          %137 = sbr.rel (%p135) target = $region20
        $region19: #{tpu_custom_call.1} parent=15 // pred_region
          %s138 = smul.u32 4, %s20
          %p139 = scmp.lt.s32.totalorder %s18, 1
          %s140 = scalar_select %p139, %s18, 1
          %p141 = scmp.lt.s32.totalorder %s138, 3
          %s142 = scalar_select %p141, %s138, 3
          %p143 = scmp.lt.s32.totalorder %s19, 0
          %s144 = scalar_select %p143, %s19, 0
          %s145 = sadd.s32 %s144, %s142
          %s146 = smul.addr %s140, 4
          %s147 = sadd.s32 %s145, %s146
          %s148 = smul.addr %s147, 8
          %s149 = scalar_lea.vmem %s0, %s148
          %s150 = smul.u32 4, %s20
        $region20: #{tpu_custom_call.1} parent=15 // pred_fallthru
          _
        // Predicated region
        $region21: #{tpu_custom_call.1} parent=15 // pred_check
          %p151 = pneg %p82
        $region22: #{tpu_custom_call.1} parent=15 // pred_check_branch
          %153 = sbr.rel (%p151) target = $region24
        $region23: #{tpu_custom_call.1} parent=15 // pred_region
          %p154 = scmp.lt.s32.totalorder %s18, 1
          %s155 = scalar_select %p154, %s18, 1
          %p156 = scmp.lt.s32.totalorder %s19, 0
          %s157 = scalar_select %p156, %s19, 0
          %s158 = sadd.s32 %s157, %s155
          %s159 = scalar_lea.vmem %s1, %s158
        $region24: #{tpu_custom_call.1} parent=15 // pred_fallthru
          _
      $region16: #{tpu_custom_call.1} parent=5 // pred_fallthru
        _
      %p160 = scmp.le.s32.totalorder 1, %s11
      %p161 = scmp.lt.s32.totalorder %s11, 3
      %p162 = pnand %p160, %p161
      %p163 = pneg %p162
      // Predicated region
      $region25: #{tpu_custom_call.1} parent=5 // pred_check
        _
      $region26: #{tpu_custom_call.1} parent=5 // pred_check_branch
        %165 = sbr.rel (%p162) target = $region28
      $region27: #{tpu_custom_call.1} parent=5 // pred_region
        %s166 = ssub.s32 %s11, 1
        %s167 = smul.u32 4, %s23
        %p168 = scmp.lt.s32.totalorder %s21, 1
        %s169 = scalar_select %p168, %s21, 1
        %p170 = scmp.lt.s32.totalorder %s167, 3
        %s171 = scalar_select %p170, %s167, 3
        %p172 = scmp.lt.s32.totalorder %s22, 0
        %s173 = scalar_select %p172, %s22, 0
        %s174 = sadd.s32 %s173, %s171
        %s175 = smul.addr %s169, 4
        %s176 = sadd.s32 %s174, %s175
        %s177 = smul.addr %s176, 8
        %s178 = scalar_lea.vmem %s0, %s177
        %p179 = pneg %p60
        %p180 = pneg %p57
        %p181 = scmp.lt.s32.totalorder %s21, 1
        %s182 = scalar_select %p181, %s21, 1
        %p183 = scmp.lt.s32.totalorder %s22, 0
        %s184 = scalar_select %p183, %s22, 0
        %s185 = sadd.s32 %s184, %s182
        %s186 = scalar_lea.vmem %s1, %s185
        %p187 = pneg %p88
        %p188 = pneg %p85
        %p189 = pneg %p116
        %p190 = pneg %p113
        %s191 = sand.u32 %s103, 1
        %s192 = scalar_lea.sflag [#allocation9], %s191
        %s193 = sand.u32 %s103, 1
        %s194 = scalar_lea.vmem [#allocation8], %s193
        %s195 = smul.u32 4, %s23
        %p196 = scmp.lt.s32.totalorder %s21, 1
        %s197 = scalar_select %p196, %s21, 1
        %p198 = scmp.lt.s32.totalorder %s195, 3
        %s199 = scalar_select %p198, %s195, 3
        %p200 = scmp.lt.s32.totalorder %s22, 0
        %s201 = scalar_select %p200, %s22, 0
        %s202 = sadd.s32 %s201, %s199
        %s203 = smul.addr %s197, 4
        %s204 = sadd.s32 %s202, %s203
        %s205 = smul.addr %s204, 8
        %s206 = scalar_lea.vmem %s0, %s205
        %s207 = smul.u32 4, %s23
        %p208 = scmp.lt.s32.totalorder %s21, 1
        %s209 = scalar_select %p208, %s21, 1
        %p210 = scmp.lt.s32.totalorder %s22, 0
        %s211 = scalar_select %p210, %s22, 0
        %s212 = sadd.s32 %s211, %s209
        %s213 = scalar_lea.vmem %s1, %s212
        %p214 = scmp.eq.s32.totalorder %s23, 0
        // Predicated region
        $region29: #{tpu_custom_call.1} parent=27 // pred_check
          %p215 = pneg %p214
        $region30: #{tpu_custom_call.1} parent=27 // pred_check_branch
          %217 = sbr.rel (%p215) target = $region32
        $region31: #{tpu_custom_call.1} parent=27 // pred_region
          %vm218 = vcmask 57344
          %219 = vst.msk [vmem:[#allocation2] sm:$0x1] %vm218, -1e+30
          %220 = vst.msk [vmem:[#allocation3] sm:$0x1] %vm218, 0.0
          %221 = vst.msk [vmem:[#allocation4] sm:$0x1] %vm218, 0.0
          %222 = vst.msk [vmem:[#allocation5] sm:$0x1] %vm218, 0.0
          %223 = vst.msk [vmem:[#allocation6] sm:$0x1] %vm218, 0.0
          %224 = vst.msk [vmem:[#allocation7] sm:$0x1] %vm218, 0.0
        $region32: #{tpu_custom_call.1} parent=27 // pred_fallthru
          _
        %v225 = vld [vmem:[%s206] sm:$0xff]
        %v226 = vld [vmem:[%s206 + $0x8] sm:$0xff]
        %v227 = vld [vmem:[%s206 + $0x10] sm:$0xff]
        %v228 = vld [vmem:[%s206 + $0x18] sm:$0xff]
        %v229 = vld [vmem:[%s213] sm:$0x1]
        %v230 = vlaneseq
        %v231 = vshrl.u32 %v230, 7
        %v232 = vadd.s32 %v231, 8
        %v233 = vadd.s32 %v231, 16
        %v234 = vadd.s32 %v231, 24
        %s235 = smul.u32 %s23, 32
        %vm236 = vweird.f32 %v225
        %vm237 = vweird.f32 %v226
        %vm238 = vweird.f32 %v227
        %vm239 = vweird.f32 %v228
        %vm240 = vmxor %vm236, 1
        %vm241 = vmxor %vm237, 1
        %vm242 = vmxor %vm238, 1
        %vm243 = vmxor %vm239, 1
        %v244 = vsel %vm240, %v225, -1e+30
        %v245 = vsel %vm241, %v226, -1e+30
        %v246 = vsel %vm242, %v227, -1e+30
        %v247 = vsel %vm243, %v228, -1e+30
        %v248 = vsel %vm240, %v225, 0.0
        %v249 = vsel %vm241, %v226, 0.0
        %v250 = vsel %vm242, %v227, 0.0
        %v251 = vsel %vm243, %v228, 0.0
        %vm252 = vcmask 64512
        %v253 = vsel %vm252, %v244, -inf
        %v254 = vsel %vm252, %v245, -inf
        %v255 = vsel %vm252, %v246, -inf
        %v256 = vsel %vm252, %v247, -inf
        %v257 = vmax.f32 %v253, %v254
        %v258 = vmax.f32 %v255, %v256
        %v259 = vmax.f32 %v257, %v258
        %v260 = vrot.slane %v259, 4
        %v261 = vmax.f32 %v259, %v260
        %v262 = vrot.slane %v261, 2
        %v263 = vmax.f32 %v261, %v262
        %v264 = vrot.slane %v263, 1
        %v265 = vmax.f32 %v263, %v264
        %v266 = vld [vmem:[#allocation2] sm:$0x1]
        %v267 = vmax.f32 %v266, %v265
        %v268 = vld [vmem:[#allocation3] sm:$0x1]
        %v269 = vsub.f32 %v266, %v267
        %v270 = vmul.f32 %v269, 1.442695
        %v271 = vpow.pop %v270
        %v272 = vmul.f32 %v268, %v271
        %v274 = vlaneseq
        %v275 = vshrl.u32 %v274, 7
        %v276 = vsub.s32 0, %v275
        %v277 = vrot.slane %v267, %v276
        %v279 = vsub.f32 %v244, %v277
        %v280 = vsub.f32 %v245, %v277
        %v281 = vsub.f32 %v246, %v277
        %v282 = vsub.f32 %v247, %v277
        %v283 = vmul.f32 %v279, 1.442695
        %v284 = vpow.pop %v283
        %v285 = vmul.f32 %v280, 1.442695
        %v286 = vpow.pop %v285
        %v287 = vmul.f32 %v281, 1.442695
        %v288 = vpow.pop %v287
        %v289 = vmul.f32 %v282, 1.442695
        %v290 = vpow.pop %v289
        %v291 = vsel %vm252, %v284, 0.0
        %v292 = vsel %vm252, %v286, 0.0
        %v293 = vadd.f32 %v291, %v292
        %v294 = vsel %vm252, %v288, 0.0
        %v295 = vadd.f32 %v293, %v294
        %v296 = vsel %vm252, %v290, 0.0
        %v297 = vadd.f32 %v295, %v296
        %v298 = vrot.slane %v297, 4
        %v299 = vadd.f32 %v297, %v298
        %v300 = vrot.slane %v299, 2
        %v301 = vadd.f32 %v299, %v300
        %v302 = vrot.slane %v301, 1
        %v303 = vadd.f32 %v301, %v302
        %v304 = vadd.f32 %v272, %v303
        %vm305 = vcmask 57344
        %306 = vst.msk [vmem:[#allocation3] sm:$0x1] %vm305, %v304
        %307 = vst.msk [vmem:[#allocation2] sm:$0x1] %vm305, %v267
        %v308 = vld [vmem:[#allocation4] sm:$0x1]
        %v309 = vsel %vm240, 1, 0
        %v310 = vsel %vm241, 1, 0
        %v311 = vsel %vm242, 1, 0
        %v312 = vsel %vm243, 1, 0
        %v313 = vcvt.s32.f32 %v309
        %v314 = vcvt.s32.f32 %v310
        %v315 = vcvt.s32.f32 %v311
        %v316 = vcvt.s32.f32 %v312
        %v317 = vsel %vm252, %v313, 0.0
        %v318 = vsel %vm252, %v314, 0.0
        %v319 = vadd.f32 %v317, %v318
        %v320 = vsel %vm252, %v315, 0.0
        %v321 = vadd.f32 %v319, %v320
        %v322 = vsel %vm252, %v316, 0.0
        %v323 = vadd.f32 %v321, %v322
        %v324 = vrot.slane %v323, 4
        %v325 = vadd.f32 %v323, %v324
        %v326 = vrot.slane %v325, 2
        %v327 = vadd.f32 %v325, %v326
        %v328 = vrot.slane %v327, 1
        %v329 = vadd.f32 %v327, %v328
        %v330 = vadd.f32 %v308, %v329
        %331 = vst.msk [vmem:[#allocation4] sm:$0x1] %vm305, %v330
        %v332 = vld [vmem:[#allocation5] sm:$0x1]
        %v333 = vsel %vm252, %v248, 0.0
        %v334 = vsel %vm252, %v249, 0.0
        %v335 = vadd.f32 %v333, %v334
        %v336 = vsel %vm252, %v250, 0.0
        %v337 = vadd.f32 %v335, %v336
        %v338 = vsel %vm252, %v251, 0.0
        %v339 = vadd.f32 %v337, %v338
        %v340 = vrot.slane %v339, 4
        %v341 = vadd.f32 %v339, %v340
        %v342 = vrot.slane %v341, 2
        %v343 = vadd.f32 %v341, %v342
        %v344 = vrot.slane %v343, 1
        %v345 = vadd.f32 %v343, %v344
        %v346 = vadd.f32 %v332, %v345
        %347 = vst.msk [vmem:[#allocation5] sm:$0x1] %vm305, %v346
        %v348 = vstv %s235
        %v349 = vsub.s32 %v229, %v348
        %v350 = vlaneseq
        %v351 = vshrl.u32 %v350, 7
        %v352 = vsub.s32 0, %v351
        %v353 = vrot.slane %v349, %v352
        %vm354 = vcmp.eq.s32.totalorder %v231, %v353
        %vm355 = vcmp.eq.s32.totalorder %v232, %v353
        %vm356 = vcmp.eq.s32.totalorder %v233, %v353
        %vm357 = vcmp.eq.s32.totalorder %v234, %v353
        %vm358 = vmand %vm354, %vm240
        %vm359 = vmand %vm355, %vm241
        %vm360 = vmand %vm356, %vm242
        %vm361 = vmand %vm357, %vm243
        %v362 = vld [vmem:[#allocation6] sm:$0x1]
        %v363 = vsel %vm358, %v225, 0.0
        %v364 = vsel %vm359, %v226, 0.0
        %v365 = vsel %vm360, %v227, 0.0
        %v366 = vsel %vm361, %v228, 0.0
        %v367 = vsel %vm252, %v363, 0.0
        %v368 = vsel %vm252, %v364, 0.0
        %v369 = vadd.f32 %v367, %v368
        %v370 = vsel %vm252, %v365, 0.0
        %v371 = vadd.f32 %v369, %v370
        %v372 = vsel %vm252, %v366, 0.0
        %v373 = vadd.f32 %v371, %v372
        %v374 = vrot.slane %v373, 4
        %v375 = vadd.f32 %v373, %v374
        %v376 = vrot.slane %v375, 2
        %v377 = vadd.f32 %v375, %v376
        %v378 = vrot.slane %v377, 1
        %v379 = vadd.f32 %v377, %v378
        %v380 = vadd.f32 %v362, %v379
        %381 = vst.msk [vmem:[#allocation6] sm:$0x1] %vm305, %v380
        %v382 = vld [vmem:[#allocation7] sm:$0x1]
        %v383 = vsel %vm358, 1, 0
        %v384 = vsel %vm359, 1, 0
        %v385 = vsel %vm360, 1, 0
        %v386 = vsel %vm361, 1, 0
        %v387 = vcvt.s32.f32 %v383
        %v388 = vcvt.s32.f32 %v384
        %v389 = vcvt.s32.f32 %v385
        %v390 = vcvt.s32.f32 %v386
        %v391 = vsel %vm252, %v387, 0.0
        %v392 = vsel %vm252, %v388, 0.0
        %v393 = vadd.f32 %v391, %v392
        %v394 = vsel %vm252, %v389, 0.0
        %v395 = vadd.f32 %v393, %v394
        %v396 = vsel %vm252, %v390, 0.0
        %v397 = vadd.f32 %v395, %v396
        %v398 = vrot.slane %v397, 4
        %v399 = vadd.f32 %v397, %v398
        %v400 = vrot.slane %v399, 2
        %v401 = vadd.f32 %v399, %v400
        %v402 = vrot.slane %v401, 1
        %v403 = vadd.f32 %v401, %v402
        %v404 = vadd.f32 %v382, %v403
        %405 = vst.msk [vmem:[#allocation7] sm:$0x1] %vm305, %v404
        // Predicated region
        $region33: #{tpu_custom_call.1} parent=27 // pred_check
          %p406 = pneg %p214
        $region34: #{tpu_custom_call.1} parent=27 // pred_check_branch
          %408 = sbr.rel (%p406) target = $region36
        $region35: #{tpu_custom_call.1} parent=27 // pred_region
          %v409 = vld [vmem:[#allocation3] sm:$0x1]
          %v410 = vlog2.pop %v409
          %v411 = vmul.f32 %v410, 0.6931472
          %v412 = vld [vmem:[#allocation2] sm:$0x1]
          %v413 = vadd.f32 %v411, %v412
          %v414 = vld [vmem:[#allocation4] sm:$0x1]
          %v415 = vld [vmem:[#allocation5] sm:$0x1]
          %v416 = vmul.f32 %v414, %v413
          %v417 = vsub.f32 %v415, %v416
          %v418 = vld [vmem:[#allocation6] sm:$0x1]
          %v419 = vld [vmem:[#allocation7] sm:$0x1]
          %v420 = vmul.f32 %v419, %v413
          %v421 = vsub.f32 %v418, %v420
          %v422 = vmax.f32 %v414, 1.0
          %v423 = vrcp.pop %v422
          %v424 = vmul.f32 0.1, %v423
          %v425 = vmul.f32 %v424, %v417
          %v426 = vmul.f32 %v421, 0.9
          %v427 = vadd.f32 %v425, %v426
          %v428 = vsub.f32 0.0, %v427
          %vm429 = vcmp.ne.s32.totalorder %v229, 4294967196
          %v430 = vsel %vm429, %v428, 0.0
          %431 = vst.msk [vmem:[%s194] sm:$0x1] %vm305, %v430
        $region36: #{tpu_custom_call.1} parent=27 // pred_fallthru
          _
        %s432 = sand.u32 %s103, 1
        %s433 = scalar_lea.sflag [#allocation9], %s432
        %s434 = sand.u32 %s103, 1
        %s435 = scalar_lea.vmem [#allocation8], %s434
        // Predicated region
        $region37: #{tpu_custom_call.1} parent=27 // pred_check
          %p436 = pneg %p113
        $region38: #{tpu_custom_call.1} parent=27 // pred_check_branch
          %438 = sbr.rel (%p436) target = $region40
        $region39: #{tpu_custom_call.1} parent=27 // pred_region
          %s440 = ssub.s32 16, 16
          %441 = vsyncadd %s433, %s440
          %s442 = sadd.s32 %s22, %s21
          %s443 = smul.addr %s442, 16
          %s444 = scalar_lea.hbm %s2, %s443
          %s446 = sshll.u32 %s435, 4
          %s447 = int_to_ptr.vmem [resolvable:$true] %s446
          %449 = dma.vmem_to_hbm [thread:$0]  %s447, 16, %s444, %s433
        $region40: #{tpu_custom_call.1} parent=27 // pred_fallthru
          _
      $region28: #{tpu_custom_call.1} parent=5 // pred_fallthru
        _
      %p450 = scmp.le.s32.totalorder 2, %s11
      // Predicated region
      $region41: #{tpu_custom_call.1} parent=5 // pred_check
        %p451 = pneg %p450
      $region42: #{tpu_custom_call.1} parent=5 // pred_check_branch
        %453 = sbr.rel (%p451) target = $region44
      $region43: #{tpu_custom_call.1} parent=5 // pred_region
        %s454 = ssub.s32 %s11, 2
        // Predicated region
        $region45: #{tpu_custom_call.1} parent=43 // pred_check
          %p455 = pneg %p119
        $region46: #{tpu_custom_call.1} parent=43 // pred_check_branch
          %457 = sbr.rel (%p455) target = $region48
        $region47: #{tpu_custom_call.1} parent=43 // pred_region
          %s458 = sand.u32 %s104, 1
          %s459 = scalar_lea.sflag [#allocation9], %s458
          %s460 = sand.u32 %s104, 1
          %s461 = scalar_lea.vmem [#allocation8], %s460
          %462 = dma.done %s459, 16
        $region48: #{tpu_custom_call.1} parent=43 // pred_fallthru
          _
      $region44: #{tpu_custom_call.1} parent=5 // pred_fallthru
        _
    $region6: #{tpu_custom_call.1} parent=1 // loop_footer
      %s15 = sadd.s32 1, %s11
    $region7: #{tpu_custom_call.1} parent=1 // loop_footer_branch
      %10 = sbr.rel target = $region3
    $region8: #{tpu_custom_call.1} parent=1 // loop_exit
      _
    %463 = vsyncpa [#allocation9], 1
    %s464 = scalar_lea.sflag [#allocation9], 1
    %465 = vsyncpa %s464, 1

</llo_original>
